<compile_context>
chip_gen: v6e
topology: v6e:2x2x1
jax: 0.10.0
libtpu: 0.0.40
codegen_flags: <defaults>
</compile_context>

<pallas_src>
import math
import functools

import jax
import jax.numpy as jnp
import numpy as np
from jax.experimental import pallas as pl
from jax.experimental.pallas import tpu as pltpu


# ---------------------------------------------------------------------------
# Pallas kernel: one grid step processes one batch element's (N, E) slab.
# ---------------------------------------------------------------------------
def _encoder_layer_kernel(*refs, seq, num_heads, att_dim, mode):
    N, H, A = seq, num_heads, att_dim
    HA = H * A

    if mode == 'sRT':
        (x_ref, wqkv_ref, wo_ref, out_ref, att_scratch) = refs
    else:
        (x_ref, wqkv_ref, wo_ref,
         ln1w_ref, ln1b_ref, w1_ref, b1_ref, w2_ref, b2_ref,
         ln2w_ref, ln2b_ref, out_ref, att_scratch) = refs

    E = x_ref.shape[-1]

    x = x_ref[...].reshape(N, E)                       # (N, E) f32
    xb = x.astype(jnp.bfloat16)

    # ---- single fused QKV projection (scale already folded into Q cols) ----
    qkv = jnp.dot(xb, wqkv_ref[...],
                  preferred_element_type=jnp.float32)  # (N, 3*H*A) f32
    qkv = qkv.astype(jnp.bfloat16)                     # half-size live copy

    # ---- attention core: heads statically unrolled; contexts stacked in a
    #      VMEM scratch so the output projection is one K=H*A matmul ---------
    for h in range(H):
        qh = qkv[:, h * A:(h + 1) * A]                 # (N, A) bf16 (pre-scaled)
        kh = qkv[:, HA + h * A:HA + (h + 1) * A]
        vh = qkv[:, 2 * HA + h * A:2 * HA + (h + 1) * A]

        s = jnp.einsum('na,ma->nm', qh, kh,
                       preferred_element_type=jnp.float32)        # (N, N) f32
        s = s - jnp.max(s, axis=-1, keepdims=True)
        p = jnp.exp(s)
        p = p * pl.reciprocal(jnp.sum(p, axis=-1, keepdims=True), approx=True)

        att = jnp.dot(p.astype(jnp.bfloat16), vh,
                      preferred_element_type=jnp.float32)         # (N, A) f32
        att_scratch[:, h * A:(h + 1) * A] = att

    # ---- single output projection over all heads ---------------------------
    z = jnp.dot(att_scratch[...].astype(jnp.bfloat16), wo_ref[...],
                preferred_element_type=jnp.float32)               # (N, E) f32

    # dropout1 is identity at inference.
    if mode == 'sRT':
        out_ref[...] = z.reshape(1, N, E)
        return

    def layer_norm(y, w, b):
        mu = jnp.mean(y, axis=-1, keepdims=True)
        var = jnp.mean(y * y, axis=-1, keepdims=True) - mu * mu   # one-pass var
        return (y - mu) * jax.lax.rsqrt(var + 1e-5) * w + b

    an = layer_norm(z + x, ln1w_ref[...], ln1b_ref[...])          # (N, E)
    h1 = jnp.dot(an.astype(jnp.bfloat16), w1_ref[...],
                 preferred_element_type=jnp.float32) + b1_ref[...]
    h1 = jnp.maximum(h1, 0.0)                                     # ReLU; ffn dropout identity
    ffn = jnp.dot(h1.astype(jnp.bfloat16), w2_ref[...],
                  preferred_element_type=jnp.float32) + b2_ref[...]
    out = layer_norm(ffn + an, ln2w_ref[...], ln2b_ref[...])
    out_ref[...] = out.reshape(1, N, E)


# ---------------------------------------------------------------------------
# Wrapper
# ---------------------------------------------------------------------------
def encoder_layer_pallas(x, params, *, mode='sRT'):
    B, N, E = x.shape
    H, _, A = params['wq'].shape
    HA = H * A

    # Host-side weight fusion: (H, E, A) -> (E, H*A), head-major columns, so
    # q_fused[:, h*A:(h+1)*A] == x @ wq[h], matching torch's permute+reshape
    # concat order.  The 1/sqrt(A) softmax scale is folded into the Q block.
    def fuse(w):
        return jnp.transpose(w, (1, 0, 2)).reshape(E, HA)

    scale = 1.0 / math.sqrt(A)
    wqkv = jnp.concatenate(
        [fuse(params['wq'] * scale), fuse(params['wk']), fuse(params['wv'])],
        axis=1).astype(jnp.bfloat16)                              # (E, 3*H*A)
    wo = params['wo'].astype(jnp.bfloat16)                        # (H*A, E)

    x32 = x.astype(jnp.float32)

    kernel = functools.partial(_encoder_layer_kernel,
                               seq=N, num_heads=H, att_dim=A, mode=mode)

    # x / out stream one batch element per (parallel) grid step; every weight
    # uses a constant index_map -> stays VMEM-resident, no re-DMA per step.
    x_spec = pl.BlockSpec((1, N, E), lambda b: (b, 0, 0))
    const2d = lambda b: (0, 0)

    operands = [x32, wqkv, wo]
    in_specs = [x_spec,
                pl.BlockSpec(wqkv.shape, const2d),
                pl.BlockSpec(wo.shape, const2d)]

    if mode != 'sRT':
        # Only pass FFN / LayerNorm weights when they are actually used.
        extra = [params['ln1w'], params['ln1b'],
                 params['w1'].astype(jnp.bfloat16), params['b1'],
                 params['w2'].astype(jnp.bfloat16), params['b2'],
                 params['ln2w'], params['ln2b']]
        operands += extra
        in_specs += [pl.BlockSpec(op.shape, const2d) for op in extra]

    out = pl.pallas_call(
        kernel,
        out_shape=jax.ShapeDtypeStruct((B, N, E), jnp.float32),
        grid=(B,),
        in_specs=in_specs,
        out_specs=pl.BlockSpec((1, N, E), lambda b: (b, 0, 0)),
        scratch_shapes=[pltpu.VMEM((N, HA), jnp.float32)],
        compiler_params=pltpu.CompilerParams(
            dimension_semantics=("parallel",)),
    )(*operands)
    return out


# ---------------------------------------------------------------------------
# Pure-JAX float32 reference (mirrors the PyTorch forward) for validation
# ---------------------------------------------------------------------------
def encoder_layer_ref(x, params, *, mode='sRT'):
    B, N, E = x.shape
    H, _, A = params['wq'].shape
    xin = x[:, None]                                             # (B,1,N,E)
    q = jnp.matmul(xin, params['wq'][None])                      # (B,H,N,A)
    k = jnp.matmul(xin, params['wk'][None])
    v = jnp.matmul(xin, params['wv'][None])
    s = jnp.matmul(q, jnp.swapaxes(k, -1, -2)) / math.sqrt(A)    # (B,H,N,N)
    p = jax.nn.softmax(s, axis=-1)
    att = jnp.matmul(p, v)                                       # (B,H,N,A)
    att = jnp.transpose(att, (0, 2, 1, 3)).reshape(B, N, H * A)
    z = jnp.matmul(att, params['wo'])                            # (B,N,E)
    if mode == 'sRT':
        return z

    def ln(y, w, b):
        mu = jnp.mean(y, axis=-1, keepdims=True)
        var = jnp.mean((y - mu) ** 2, axis=-1, keepdims=True)
        return (y - mu) / jnp.sqrt(var + 1e-5) * w[0] + b[0]

    an = ln(z + x, params['ln1w'], params['ln1b'])
    h1 = jax.nn.relu(jnp.matmul(an, params['w1']) + params['b1'][0])
    ffn = jnp.matmul(h1, params['w2']) + params['b2'][0]
    return ln(ffn + an, params['ln2w'], params['ln2b'])


# ---------------------------------------------------------------------------
# Deterministic parameter construction (synthetic, mirrors __init__ shapes)
# ---------------------------------------------------------------------------
def make_params(key, emb_dim, att_dim, num_heads):
    def xavier_uniform(k, shape, gain):
        recept = int(np.prod(shape[2:])) if len(shape) > 2 else 1
        fan_in, fan_out = shape[1] * recept, shape[0] * recept
        bound = gain * math.sqrt(6.0 / (fan_in + fan_out))
        return jax.random.uniform(k, shape, jnp.float32, -bound, bound)

    def linear_init(k, fan_in, shape):
        bound = 1.0 / math.sqrt(fan_in)
        return jax.random.uniform(k, shape, jnp.float32, -bound, bound)

    gain = math.sqrt(2.0)  # nn.init.calculate_gain('relu')
    ks = jax.random.split(key, 8)
    E, A, H = emb_dim, att_dim, num_heads
    return {
        'wq': xavier_uniform(ks[0], (H, E, A), gain),
        'wk': xavier_uniform(ks[1], (H, E, A), gain),
        'wv': xavier_uniform(ks[2], (H, E, A), gain),
        'wo': xavier_uniform(ks[3], (H * A, E), gain),
        'ln1w': jnp.ones((1, E), jnp.float32),
        'ln1b': jnp.zeros((1, E), jnp.float32),
        'w1': linear_init(ks[4], E, (E, A)),      # linear1: E -> A (stored (in,out))
        'b1': linear_init(ks[5], E, (1, A)),
        'w2': linear_init(ks[6], A, (A, E)),      # linear2: A -> E
        'b2': linear_init(ks[7], A, (1, E)),
        'ln2w': jnp.ones((1, E), jnp.float32),
        'ln2b': jnp.zeros((1, E), jnp.float32),
    }


if __name__ == "__main__":
    B, N, E, A, H = 2, 8, 32, 16, 4
    key = jax.random.PRNGKey(0)
    kx, kp = jax.random.split(key)
    x = jax.random.normal(kx, (B, N, E), jnp.float32)
    params = make_params(kp, E, A, H)

    # TODO(synk): dropout layers are treated as identity (inference mode);
    # stochastic dropout masks are not reproduced.

    ok = True
    for mode in ('sRT', 'RT'):
        out = encoder_layer_pallas(x, params, mode=mode)
        out = jax.block_until_ready(out)
        ref = encoder_layer_ref(x, params, mode=mode)
        # bf16 MXU inputs (weights AND activations; f32 accumulation) compared
        # against a pure-f32 reference -> correspondingly loosened tolerance.
        ok &= bool(jnp.allclose(out, ref, atol=2.5e-2, rtol=2.5e-2))

    if ok:
        print("KERNEL_OK")
    else:
        print("MISMATCH")
</pallas_src>

<mosaic_0001>
module attributes {stable_mosaic.version = 11 : i64} {
  func.func @_encoder_layer_kernel(%arg0: i32, %arg1: memref<1x8x32xf32, #tpu.memory_space<vmem>>, %arg2: memref<32x192xbf16, #tpu.memory_space<vmem>>, %arg3: memref<64x32xbf16, #tpu.memory_space<vmem>>, %arg4: memref<1x8x32xf32, #tpu.memory_space<vmem>>, %arg5: memref<8x64xf32, #tpu.memory_space<vmem>>) attributes {dimension_semantics = [#tpu.dimension_semantics<parallel>], iteration_bounds = array<i64: 2>, scalar_prefetch = 0 : i64, scratch_operands = 1 : i64, tpu.core_type = #tpu.core_type<tc>, window_params = [{transform_indices = @transform_0, window_bounds = array<i64: 1, 8, 32>}, {pipeline_mode = #tpu.pipeline_mode<synchronous>, transform_indices = @transform_1, window_bounds = array<i64: 32, 192>}, {pipeline_mode = #tpu.pipeline_mode<synchronous>, transform_indices = @transform_2, window_bounds = array<i64: 64, 32>}, {transform_indices = @transform_3, window_bounds = array<i64: 1, 8, 32>}]} {
    %c0 = arith.constant 0 : index
    %c0_0 = arith.constant 0 : index
    %c0_1 = arith.constant 0 : index
    %0 = vector.load %arg1[%c0, %c0_0, %c0_1] : memref<1x8x32xf32, #tpu.memory_space<vmem>>, vector<1x8x32xf32>
    %1 = vector.shape_cast %0 : vector<1x8x32xf32> to vector<8x32xf32>
    %2 = arith.truncf %1 : vector<8x32xf32> to vector<8x32xbf16>
    %c0_2 = arith.constant 0 : index
    %c0_3 = arith.constant 0 : index
    %3 = vector.load %arg2[%c0_2, %c0_3] : memref<32x192xbf16, #tpu.memory_space<vmem>>, vector<32x192xbf16>
    %cst = arith.constant dense<0.000000e+00> : vector<8x192xf32>
    %4 = tpu.matmul %2, %3, %cst {dimension_numbers = #tpu.dot_dimension_numbers<[1], [0], [0], [1], [0, 0, 1, 1], [], []>} : vector<8x32xbf16>, vector<32x192xbf16>, vector<8x192xf32> -> vector<8x192xf32>
    %5 = arith.truncf %4 : vector<8x192xf32> to vector<8x192xbf16>
    %6 = vector.extract_strided_slice %5 {offsets = [0, 0], sizes = [8, 16], strides = [1, 1]} : vector<8x192xbf16> to vector<8x16xbf16>
    %7 = vector.extract_strided_slice %5 {offsets = [0, 64], sizes = [8, 16], strides = [1, 1]} : vector<8x192xbf16> to vector<8x16xbf16>
    %8 = vector.extract_strided_slice %5 {offsets = [0, 128], sizes = [8, 16], strides = [1, 1]} : vector<8x192xbf16> to vector<8x16xbf16>
    "tpu.trace_start"() <{level = 10 : i32, message = "na,ma->nm"}> : () -> ()
    %cst_4 = arith.constant dense<0.000000e+00> : vector<8x8xf32>
    %9 = tpu.matmul %6, %7, %cst_4 {dimension_numbers = #tpu.dot_dimension_numbers<[1], [1], [0], [0], [0, 0, 1, 0], [], []>} : vector<8x16xbf16>, vector<8x16xbf16>, vector<8x8xf32> -> vector<8x8xf32>
    "tpu.trace_stop"() : () -> ()
    %cst_5 = arith.constant dense<0xFF800000> : vector<8xf32>
    %10 = vector.multi_reduction <maximumf>, %9, %cst_5 [1] : vector<8x8xf32> to vector<8xf32>
    %11 = vector.shape_cast %10 : vector<8xf32> to vector<8x1xf32>
    %12 = vector.broadcast %11 : vector<8x1xf32> to vector<8x8xf32>
    %13 = arith.subf %9, %12 : vector<8x8xf32>
    %14 = math.exp %13 : vector<8x8xf32>
    %cst_6 = arith.constant dense<0.000000e+00> : vector<8xf32>
    %15 = vector.multi_reduction <add>, %14, %cst_6 [1] : vector<8x8xf32> to vector<8xf32>
    %16 = vector.shape_cast %15 : vector<8xf32> to vector<8x1xf32>
    %17 = tpu.reciprocal %16 {approx = true} : vector<8x1xf32> -> vector<8x1xf32>
    %18 = vector.broadcast %17 : vector<8x1xf32> to vector<8x8xf32>
    %19 = arith.mulf %14, %18 : vector<8x8xf32>
    %20 = arith.truncf %19 : vector<8x8xf32> to vector<8x8xbf16>
    %cst_7 = arith.constant dense<0.000000e+00> : vector<8x16xf32>
    %21 = tpu.matmul %20, %8, %cst_7 {dimension_numbers = #tpu.dot_dimension_numbers<[1], [0], [0], [1], [0, 0, 1, 1], [], []>} : vector<8x8xbf16>, vector<8x16xbf16>, vector<8x16xf32> -> vector<8x16xf32>
    %c0_8 = arith.constant 0 : index
    %c0_9 = arith.constant 0 : index
    %22 = vector.load %arg5[%c0_8, %c0_9] : memref<8x64xf32, #tpu.memory_space<vmem>>, vector<8x16xf32>
    tpu.vector_store %arg5[%c0_8, %c0_9], %21 {strides = array<i32>} : memref<8x64xf32, #tpu.memory_space<vmem>>, vector<8x16xf32>,
    %23 = vector.extract_strided_slice %5 {offsets = [0, 16], sizes = [8, 16], strides = [1, 1]} : vector<8x192xbf16> to vector<8x16xbf16>
    %24 = vector.extract_strided_slice %5 {offsets = [0, 80], sizes = [8, 16], strides = [1, 1]} : vector<8x192xbf16> to vector<8x16xbf16>
    %25 = vector.extract_strided_slice %5 {offsets = [0, 144], sizes = [8, 16], strides = [1, 1]} : vector<8x192xbf16> to vector<8x16xbf16>
    "tpu.trace_start"() <{level = 10 : i32, message = "na,ma->nm"}> : () -> ()
    %cst_10 = arith.constant dense<0.000000e+00> : vector<8x8xf32>
    %26 = tpu.matmul %23, %24, %cst_10 {dimension_numbers = #tpu.dot_dimension_numbers<[1], [1], [0], [0], [0, 0, 1, 0], [], []>} : vector<8x16xbf16>, vector<8x16xbf16>, vector<8x8xf32> -> vector<8x8xf32>
    "tpu.trace_stop"() : () -> ()
    %cst_11 = arith.constant dense<0xFF800000> : vector<8xf32>
    %27 = vector.multi_reduction <maximumf>, %26, %cst_11 [1] : vector<8x8xf32> to vector<8xf32>
    %28 = vector.shape_cast %27 : vector<8xf32> to vector<8x1xf32>
    %29 = vector.broadcast %28 : vector<8x1xf32> to vector<8x8xf32>
    %30 = arith.subf %26, %29 : vector<8x8xf32>
    %31 = math.exp %30 : vector<8x8xf32>
    %cst_12 = arith.constant dense<0.000000e+00> : vector<8xf32>
    %32 = vector.multi_reduction <add>, %31, %cst_12 [1] : vector<8x8xf32> to vector<8xf32>
    %33 = vector.shape_cast %32 : vector<8xf32> to vector<8x1xf32>
    %34 = tpu.reciprocal %33 {approx = true} : vector<8x1xf32> -> vector<8x1xf32>
    %35 = vector.broadcast %34 : vector<8x1xf32> to vector<8x8xf32>
    %36 = arith.mulf %31, %35 : vector<8x8xf32>
    %37 = arith.truncf %36 : vector<8x8xf32> to vector<8x8xbf16>
    %cst_13 = arith.constant dense<0.000000e+00> : vector<8x16xf32>
    %38 = tpu.matmul %37, %25, %cst_13 {dimension_numbers = #tpu.dot_dimension_numbers<[1], [0], [0], [1], [0, 0, 1, 1], [], []>} : vector<8x8xbf16>, vector<8x16xbf16>, vector<8x16xf32> -> vector<8x16xf32>
    %c0_14 = arith.constant 0 : index
    %c16 = arith.constant 16 : index
    %39 = vector.load %arg5[%c0_14, %c16] : memref<8x64xf32, #tpu.memory_space<vmem>>, vector<8x16xf32>
    tpu.vector_store %arg5[%c0_14, %c16], %38 {strides = array<i32>} : memref<8x64xf32, #tpu.memory_space<vmem>>, vector<8x16xf32>,
    %40 = vector.extract_strided_slice %5 {offsets = [0, 32], sizes = [8, 16], strides = [1, 1]} : vector<8x192xbf16> to vector<8x16xbf16>
    %41 = vector.extract_strided_slice %5 {offsets = [0, 96], sizes = [8, 16], strides = [1, 1]} : vector<8x192xbf16> to vector<8x16xbf16>
    %42 = vector.extract_strided_slice %5 {offsets = [0, 160], sizes = [8, 16], strides = [1, 1]} : vector<8x192xbf16> to vector<8x16xbf16>
    "tpu.trace_start"() <{level = 10 : i32, message = "na,ma->nm"}> : () -> ()
    %cst_15 = arith.constant dense<0.000000e+00> : vector<8x8xf32>
    %43 = tpu.matmul %40, %41, %cst_15 {dimension_numbers = #tpu.dot_dimension_numbers<[1], [1], [0], [0], [0, 0, 1, 0], [], []>} : vector<8x16xbf16>, vector<8x16xbf16>, vector<8x8xf32> -> vector<8x8xf32>
    "tpu.trace_stop"() : () -> ()
    %cst_16 = arith.constant dense<0xFF800000> : vector<8xf32>
    %44 = vector.multi_reduction <maximumf>, %43, %cst_16 [1] : vector<8x8xf32> to vector<8xf32>
    %45 = vector.shape_cast %44 : vector<8xf32> to vector<8x1xf32>
    %46 = vector.broadcast %45 : vector<8x1xf32> to vector<8x8xf32>
    %47 = arith.subf %43, %46 : vector<8x8xf32>
    %48 = math.exp %47 : vector<8x8xf32>
    %cst_17 = arith.constant dense<0.000000e+00> : vector<8xf32>
    %49 = vector.multi_reduction <add>, %48, %cst_17 [1] : vector<8x8xf32> to vector<8xf32>
    %50 = vector.shape_cast %49 : vector<8xf32> to vector<8x1xf32>
    %51 = tpu.reciprocal %50 {approx = true} : vector<8x1xf32> -> vector<8x1xf32>
    %52 = vector.broadcast %51 : vector<8x1xf32> to vector<8x8xf32>
    %53 = arith.mulf %48, %52 : vector<8x8xf32>
    %54 = arith.truncf %53 : vector<8x8xf32> to vector<8x8xbf16>
    %cst_18 = arith.constant dense<0.000000e+00> : vector<8x16xf32>
    %55 = tpu.matmul %54, %42, %cst_18 {dimension_numbers = #tpu.dot_dimension_numbers<[1], [0], [0], [1], [0, 0, 1, 1], [], []>} : vector<8x8xbf16>, vector<8x16xbf16>, vector<8x16xf32> -> vector<8x16xf32>
    %c0_19 = arith.constant 0 : index
    %c32 = arith.constant 32 : index
    %56 = vector.load %arg5[%c0_19, %c32] : memref<8x64xf32, #tpu.memory_space<vmem>>, vector<8x16xf32>
    tpu.vector_store %arg5[%c0_19, %c32], %55 {strides = array<i32>} : memref<8x64xf32, #tpu.memory_space<vmem>>, vector<8x16xf32>,
    %57 = vector.extract_strided_slice %5 {offsets = [0, 48], sizes = [8, 16], strides = [1, 1]} : vector<8x192xbf16> to vector<8x16xbf16>
    %58 = vector.extract_strided_slice %5 {offsets = [0, 112], sizes = [8, 16], strides = [1, 1]} : vector<8x192xbf16> to vector<8x16xbf16>
    %59 = vector.extract_strided_slice %5 {offsets = [0, 176], sizes = [8, 16], strides = [1, 1]} : vector<8x192xbf16> to vector<8x16xbf16>
    "tpu.trace_start"() <{level = 10 : i32, message = "na,ma->nm"}> : () -> ()
    %cst_20 = arith.constant dense<0.000000e+00> : vector<8x8xf32>
    %60 = tpu.matmul %57, %58, %cst_20 {dimension_numbers = #tpu.dot_dimension_numbers<[1], [1], [0], [0], [0, 0, 1, 0], [], []>} : vector<8x16xbf16>, vector<8x16xbf16>, vector<8x8xf32> -> vector<8x8xf32>
    "tpu.trace_stop"() : () -> ()
    %cst_21 = arith.constant dense<0xFF800000> : vector<8xf32>
    %61 = vector.multi_reduction <maximumf>, %60, %cst_21 [1] : vector<8x8xf32> to vector<8xf32>
    %62 = vector.shape_cast %61 : vector<8xf32> to vector<8x1xf32>
    %63 = vector.broadcast %62 : vector<8x1xf32> to vector<8x8xf32>
    %64 = arith.subf %60, %63 : vector<8x8xf32>
    %65 = math.exp %64 : vector<8x8xf32>
    %cst_22 = arith.constant dense<0.000000e+00> : vector<8xf32>
    %66 = vector.multi_reduction <add>, %65, %cst_22 [1] : vector<8x8xf32> to vector<8xf32>
    %67 = vector.shape_cast %66 : vector<8xf32> to vector<8x1xf32>
    %68 = tpu.reciprocal %67 {approx = true} : vector<8x1xf32> -> vector<8x1xf32>
    %69 = vector.broadcast %68 : vector<8x1xf32> to vector<8x8xf32>
    %70 = arith.mulf %65, %69 : vector<8x8xf32>
    %71 = arith.truncf %70 : vector<8x8xf32> to vector<8x8xbf16>
    %cst_23 = arith.constant dense<0.000000e+00> : vector<8x16xf32>
    %72 = tpu.matmul %71, %59, %cst_23 {dimension_numbers = #tpu.dot_dimension_numbers<[1], [0], [0], [1], [0, 0, 1, 1], [], []>} : vector<8x8xbf16>, vector<8x16xbf16>, vector<8x16xf32> -> vector<8x16xf32>
    %c0_24 = arith.constant 0 : index
    %c48 = arith.constant 48 : index
    %73 = vector.load %arg5[%c0_24, %c48] : memref<8x64xf32, #tpu.memory_space<vmem>>, vector<8x16xf32>
    tpu.vector_store %arg5[%c0_24, %c48], %72 {strides = array<i32>} : memref<8x64xf32, #tpu.memory_space<vmem>>, vector<8x16xf32>,
    %c0_25 = arith.constant 0 : index
    %c0_26 = arith.constant 0 : index
    %74 = vector.load %arg5[%c0_25, %c0_26] : memref<8x64xf32, #tpu.memory_space<vmem>>, vector<8x64xf32>
    %75 = arith.truncf %74 : vector<8x64xf32> to vector<8x64xbf16>
    %c0_27 = arith.constant 0 : index
    %c0_28 = arith.constant 0 : index
    %76 = vector.load %arg3[%c0_27, %c0_28] : memref<64x32xbf16, #tpu.memory_space<vmem>>, vector<64x32xbf16>
    %cst_29 = arith.constant dense<0.000000e+00> : vector<8x32xf32>
    %77 = tpu.matmul %75, %76, %cst_29 {dimension_numbers = #tpu.dot_dimension_numbers<[1], [0], [0], [1], [0, 0, 1, 1], [], []>} : vector<8x64xbf16>, vector<64x32xbf16>, vector<8x32xf32> -> vector<8x32xf32>
    %78 = vector.shape_cast %77 : vector<8x32xf32> to vector<1x8x32xf32>
    %c0_30 = arith.constant 0 : index
    %c0_31 = arith.constant 0 : index
    %c0_32 = arith.constant 0 : index
    %79 = vector.load %arg4[%c0_30, %c0_31, %c0_32] : memref<1x8x32xf32, #tpu.memory_space<vmem>>, vector<1x8x32xf32>
    tpu.vector_store %arg4[%c0_30, %c0_31, %c0_32], %78 {strides = array<i32>} : memref<1x8x32xf32, #tpu.memory_space<vmem>>, vector<1x8x32xf32>,
    return
  }
  func.func @transform_0(%arg0: i32) -> (i32, i32, i32) {
    %c0_i32 = arith.constant 0 : i32
    %c0_i32_0 = arith.constant 0 : i32
    %c0_i32_1 = arith.constant 0 : i32
    return %arg0, %c0_i32, %c0_i32_0 : i32, i32, i32
  }
  func.func @transform_1(%arg0: i32) -> (i32, i32) {
    %c0_i32 = arith.constant 0 : i32
    %c0_i32_0 = arith.constant 0 : i32
    %c0_i32_1 = arith.constant 0 : i32
    return %c0_i32, %c0_i32_0 : i32, i32
  }
  func.func @transform_2(%arg0: i32) -> (i32, i32) {
    %c0_i32 = arith.constant 0 : i32
    %c0_i32_0 = arith.constant 0 : i32
    %c0_i32_1 = arith.constant 0 : i32
    return %c0_i32, %c0_i32_0 : i32, i32
  }
  func.func @transform_3(%arg0: i32) -> (i32, i32, i32) {
    %c0_i32 = arith.constant 0 : i32
    %c0_i32_0 = arith.constant 0 : i32
    %c0_i32_1 = arith.constant 0 : i32
    return %arg0, %c0_i32, %c0_i32_0 : i32, i32, i32
  }
}

</mosaic_0001>

<llo_original>
// kernel: tpu_custom_call.1
$region0: #{tpu_custom_call.1}
  #allocation0 [shape = 'u32[]', space=smem, size = 0x4, offset = 0x4, fixed_abs, tag = 'smem constant byte address 0x4 - core index']
  #allocation1 [shape = 'u32[144,128]{1,0:T(1,128)}', space=vmem, size = 0x12000, scoped, tag = 'internal scratch']
  #allocation2 [shape = 'f32[8,64]{1,0:T(8,128)}', space=vmem, size = 0x1000, scoped, tag = 'scratch operand']
  %s0 = inlined_call_operand.vmem [shape: f32[2,8,32], index: 0, kind: input, shape index: {}]
  %s1 = inlined_call_operand.vmem [shape: bf16[32,192], index: 1, kind: input, shape index: {}]
  %s2 = inlined_call_operand.vmem [shape: bf16[64,32], index: 2, kind: input, shape index: {}]
  %s3 = inlined_call_operand.hbm [shape: f32[2,8,32], index: 3, kind: output, shape index: {}]
  %s4 = sld [smem:[#allocation0]]
  $region45: #{tpu_custom_call.1} parent=0
    _
  %s6 = ssub.s32 1, %s4
  %s7 = scalar_select 0, %s6, %s4
  $region1: #{tpu_custom_call.1} parent=0
    #allocation3 [shape = 'u8[8192]{0}', space=vmem, size = 0x2000, scoped, tag = 'output window, operand 0']
    #allocation4 [shape = 's32[2]{0}', space=sflag, size = 0x8, scoped, tag = 'scoped memory for tpu_custom_call.1']
    %8 = vsyncpa [#allocation4], 0
    %s9 = scalar_lea.sflag [#allocation4], 1
    %10 = vsyncpa %s9, 0
    loop: start=0, step=1, limit=4
    $region2: #{tpu_custom_call.1} parent=1 // loop_pre_header
      _
    $region3: #{tpu_custom_call.1} parent=1 // loop_header
      %s12 = sphi 0, %s16
      %p13 = scmp.ge.s32.totalorder %s12, 4
      %s22 = sphi 0, %s24
      %s25 = sphi 0, %s22
      %s26 = sphi 0, %s25
      %s42 = sphi 0, %s26
      %s46 = sphi 0, %s46
      %s48 = sphi 0, %s46
      %s49 = sphi 0, %s48
      %s63 = sphi 0, %s49
      %s67 = sphi 0, %s67
      %s69 = sphi 0, %s67
      %s70 = sphi 0, %s69
      %s84 = sphi 0, %s70
      %s90 = sphi 0, %s92
      %s93 = sphi 0, %s90
      %s94 = sphi 0, %s93
      %s110 = sphi 0, %s94
    $region4: #{tpu_custom_call.1} parent=1 // loop_header_branch
      %15 = sbr.rel (%p13) target = $region8
    $region5: #{tpu_custom_call.1} parent=1 // loop_body
      %s17 = ssub.s32 %s12, 1
      %s18 = ssub.s32 %s12, 2
      %s19 = sadd.s32 %s12, 1
      %s20 = ssub.s32 %s12, %s19
      %p21 = scmp.eq.s32.totalorder %s20, 0
      %s23 = sadd.s32 %s22, 1
      %s24 = scalar_select %p21, %s22, %s23
      %p27 = pneg %p21
      %p28 = scmp.eq.s32.totalorder %s12, 1
      %p29 = por %p27, %p28
      %p30 = scmp.ne.s32.totalorder %s22, %s25
      %p31 = scmp.eq.s32.totalorder %s12, 0
      %p32 = por %p30, %p31
      %p33 = scmp.ne.s32.totalorder %s22, %s25
      %p34 = scmp.eq.s32.totalorder %s17, 1
      %p35 = por %p33, %p34
      %p36 = scmp.ne.s32.totalorder %s25, %s26
      %p37 = scmp.eq.s32.totalorder %s17, 0
      %p38 = por %p36, %p37
      %p39 = scmp.ne.s32.totalorder %s25, %s26
      %p40 = scmp.eq.s32.totalorder %s18, 1
      %p41 = por %p39, %p40
      %p43 = scmp.ne.s32.totalorder %s26, %s42
      %p44 = scmp.eq.s32.totalorder %s18, 0
      %p45 = por %p43, %p44
      %s47 = sadd.s32 %s46, 1
      %p50 = scmp.eq.s32.totalorder %s12, 1
      %p51 = scmp.ne.s32.totalorder %s46, %s48
      %p52 = scmp.eq.s32.totalorder %s12, 0
      %p53 = por %p51, %p52
      %p54 = scmp.ne.s32.totalorder %s46, %s48
      %p55 = scmp.eq.s32.totalorder %s17, 1
      %p56 = por %p54, %p55
      %p57 = scmp.ne.s32.totalorder %s48, %s49
      %p58 = scmp.eq.s32.totalorder %s17, 0
      %p59 = por %p57, %p58
      %p60 = scmp.ne.s32.totalorder %s48, %s49
      %p61 = scmp.eq.s32.totalorder %s18, 1
      %p62 = por %p60, %p61
      %p64 = scmp.ne.s32.totalorder %s49, %s63
      %p65 = scmp.eq.s32.totalorder %s18, 0
      %p66 = por %p64, %p65
      %s68 = sadd.s32 %s67, 1
      %p71 = scmp.eq.s32.totalorder %s12, 1
      %p72 = scmp.ne.s32.totalorder %s67, %s69
      %p73 = scmp.eq.s32.totalorder %s12, 0
      %p74 = por %p72, %p73
      %p75 = scmp.ne.s32.totalorder %s67, %s69
      %p76 = scmp.eq.s32.totalorder %s17, 1
      %p77 = por %p75, %p76
      %p78 = scmp.ne.s32.totalorder %s69, %s70
      %p79 = scmp.eq.s32.totalorder %s17, 0
      %p80 = por %p78, %p79
      %p81 = scmp.ne.s32.totalorder %s69, %s70
      %p82 = scmp.eq.s32.totalorder %s18, 1
      %p83 = por %p81, %p82
      %p85 = scmp.ne.s32.totalorder %s70, %s84
      %p86 = scmp.eq.s32.totalorder %s18, 0
      %p87 = por %p85, %p86
      %s88 = ssub.s32 %s12, %s19
      %p89 = scmp.eq.s32.totalorder %s88, 0
      %s91 = sadd.s32 %s90, 1
      %s92 = scalar_select %p89, %s90, %s91
      %p95 = pneg %p89
      %p96 = scmp.eq.s32.totalorder %s12, 1
      %p97 = por %p95, %p96
      %p98 = scmp.ne.s32.totalorder %s90, %s93
      %p99 = scmp.eq.s32.totalorder %s12, 0
      %p100 = por %p98, %p99
      %p101 = scmp.ne.s32.totalorder %s90, %s93
      %p102 = scmp.eq.s32.totalorder %s17, 1
      %p103 = por %p101, %p102
      %p104 = scmp.ne.s32.totalorder %s93, %s94
      %p105 = scmp.eq.s32.totalorder %s17, 0
      %p106 = por %p104, %p105
      %p107 = scmp.ne.s32.totalorder %s93, %s94
      %p108 = scmp.eq.s32.totalorder %s18, 1
      %p109 = por %p107, %p108
      %p111 = scmp.ne.s32.totalorder %s94, %s110
      %p112 = scmp.eq.s32.totalorder %s18, 0
      %p113 = por %p111, %p112
      %p114 = scmp.le.s32.totalorder 1, %s12
      %p115 = scmp.lt.s32.totalorder %s12, 3
      %p116 = pnand %p114, %p115
      %p117 = pneg %p116
      // Predicated region
      $region9: #{tpu_custom_call.1} parent=5 // pred_check
        _
      $region10: #{tpu_custom_call.1} parent=5 // pred_check_branch
        %119 = sbr.rel (%p116) target = $region12
      $region11: #{tpu_custom_call.1} parent=5 // pred_region
        %s120 = ssub.s32 %s12, 1
        // Predicated region
        $region13: #{tpu_custom_call.1} parent=11 // pred_check
          %p121 = pneg %p59
        $region14: #{tpu_custom_call.1} parent=11 // pred_check_branch
          %123 = sbr.rel (%p121) target = $region16
        $region15: #{tpu_custom_call.1} parent=11 // pred_region
          _
        $region16: #{tpu_custom_call.1} parent=11 // pred_fallthru
          _
        // Predicated region
        $region17: #{tpu_custom_call.1} parent=11 // pred_check
          %p124 = pneg %p80
        $region18: #{tpu_custom_call.1} parent=11 // pred_check_branch
          %126 = sbr.rel (%p124) target = $region20
        $region19: #{tpu_custom_call.1} parent=11 // pred_region
          _
        $region20: #{tpu_custom_call.1} parent=11 // pred_fallthru
          _
      $region12: #{tpu_custom_call.1} parent=5 // pred_fallthru
        _
      %p127 = scmp.lt.s32.totalorder %s12, 2
      // Predicated region
      $region21: #{tpu_custom_call.1} parent=5 // pred_check
        %p128 = pneg %p127
      $region22: #{tpu_custom_call.1} parent=5 // pred_check_branch
        %130 = sbr.rel (%p128) target = $region24
      $region23: #{tpu_custom_call.1} parent=5 // pred_region
        // Predicated region
        $region25: #{tpu_custom_call.1} parent=23 // pred_check
          %p131 = pneg %p32
        $region26: #{tpu_custom_call.1} parent=23 // pred_check_branch
          %133 = sbr.rel (%p131) target = $region28
        $region27: #{tpu_custom_call.1} parent=23 // pred_region
          %p134 = scmp.lt.s32.totalorder %s12, 1
          %s135 = scalar_select %p134, %s12, 1
          %s136 = smul.addr %s135, 8
          %s137 = scalar_lea.vmem %s0, %s136
        $region28: #{tpu_custom_call.1} parent=23 // pred_fallthru
          _
      $region24: #{tpu_custom_call.1} parent=5 // pred_fallthru
        _
      %p138 = scmp.le.s32.totalorder 1, %s12
      %p139 = scmp.lt.s32.totalorder %s12, 3
      %p140 = pnand %p138, %p139
      %p141 = pneg %p140
      // Predicated region
      $region29: #{tpu_custom_call.1} parent=5 // pred_check
        _
      $region30: #{tpu_custom_call.1} parent=5 // pred_check_branch
        %143 = sbr.rel (%p140) target = $region32
      $region31: #{tpu_custom_call.1} parent=5 // pred_region
        %s144 = ssub.s32 %s12, 1
        %p145 = scmp.lt.s32.totalorder %s17, 1
        %s146 = scalar_select %p145, %s17, 1
        %s147 = smul.addr %s146, 8
        %s148 = scalar_lea.vmem %s0, %s147
        %p149 = pneg %p38
        %p150 = pneg %p35
        %p151 = pneg %p59
        %p152 = pneg %p56
        %p153 = pneg %p80
        %p154 = pneg %p77
        %p155 = pneg %p106
        %p156 = pneg %p103
        %s157 = sand.u32 %s93, 1
        %s158 = scalar_lea.sflag [#allocation4], %s157
        %s159 = sand.u32 %s93, 1
        %s160 = smul.addr %s159, 8
        %s161 = scalar_lea.vmem [#allocation3], %s160
        %p162 = scmp.lt.s32.totalorder %s17, 1
        %s163 = scalar_select %p162, %s17, 1
        %s164 = smul.addr %s163, 8
        %s165 = scalar_lea.vmem %s0, %s164
        %v167 = vld [vmem:[%s165] sm:$0xff]
        %v168 = vpack.c.bf16 %v167, %v167
        %v169 = vld [vmem:[%s1] sm:$0xff]
        %v170 = vld [vmem:[%s1 + $0x8] sm:$0xff]
        %v171 = vld [vmem:[%s1 + $0x10] sm:$0xff]
        %v172 = vld [vmem:[%s1 + $0x18] sm:$0xff]
        %v177 = vunpack.c.l.b16 %v169
        %v178 = vunpack.c.h.b16 %v169
        %v179 = vunpack.c.l.b16 %v170
        %v180 = vunpack.c.h.b16 %v170
        %v181 = vunpack.c.l.b16 %v171
        %v182 = vunpack.c.h.b16 %v171
        %v183 = vunpack.c.l.b16 %v172
        %v184 = vunpack.c.h.b16 %v172
        %v185 = vpack.c.b16 %v179, %v177
        %v186 = vpack.c.b16 %v180, %v178
        %v187 = vpack.c.b16 %v183, %v181
        %v188 = vpack.c.b16 %v184, %v182
        %vm193 = vcmask 261120
        %v195 = vsel %vm193, %v168, 0
        %197 = vmatprep.subr.bf16.mxu0 0
        %198 = vmatpush1.bf16.msra.mxu0 0
        %199 = vmatprep.subr.bf16.mxu0 0
        %200 = vmatpush1.bf16.msra.mxu0 0
        %201 = vmatprep.subr.bf16.mxu0 0
        %202 = vmatpush1.bf16.msra.mxu0 0
        %203 = vmatprep.subr.bf16.mxu0 0
        %204 = vmatpush1.bf16.msra.mxu0 0
        %205 = vmatprep.subr.bf16.mxu0 0
        %206 = vmatpush1.bf16.msra.mxu0 0
        %207 = vmatprep.subr.bf16.mxu0 0
        %208 = vmatpush1.bf16.msra.mxu0 0
        %209 = vmatprep.subr.bf16.mxu0 %v188
        %210 = vmatpush1.bf16.msra.mxu0 %v187
        %211 = vmatprep.subr.bf16.mxu0 %v186
        %212 = vmatpush1.bf16.msra.mxu0 %v185
        %213 = vmatprep.subr.bf16.mxu0 0
        %214 = vmatpush2.bf16.msra.mxu0 0
        %215 = vmatprep.subr.bf16.mxu0 0
        %216 = vmatpush2.bf16.msra.mxu0 0
        %217 = vmatprep.subr.bf16.mxu0 0
        %218 = vmatpush2.bf16.msra.mxu0 0
        %219 = vmatprep.subr.bf16.mxu0 0
        %220 = vmatpush2.bf16.msra.mxu0 0
        %221 = vmatprep.subr.bf16.mxu0 0
        %222 = vmatpush2.bf16.msra.mxu0 0
        %223 = vmatprep.subr.bf16.mxu0 0
        %224 = vmatpush2.bf16.msra.mxu0 0
        %225 = vmatprep.subr.bf16.mxu0 0
        %226 = vmatpush2.bf16.msra.mxu0 0
        %227 = vmatprep.subr.bf16.mxu0 0
        %228 = vmatpush2.bf16.msra.mxu0 0
        %229 = vmatprep.mubr.bf16.mxu0 0
        %230 = vmatmul.mubr.bf16.gmra.mxu0 %v195
        %v231 = vpop.f32.mrf.mxu0
        %v232 = vadd.f32 0.0, %v231
        %v233 = vpop.f32.mrf.mxu0
        %v234 = vadd.f32 0.0, %v233
        %v235 = vpop.f32.mrf.mxu0
        %v236 = vpop.f32.mrf.mxu0
        %237 = vdwg.mxu0
        %v238 = vpack.c.bf16 %v232, %v232
        %v239 = vpack.c.bf16 %v234, %v234
        %241 = vrot.lane.b32.xlu0 %v238, 64
        %v242 = vpop.permute.xlu0 %241
        %vm243 = vcmask 130048
        %v245 = vsel %vm243, %v238, 0
        %v248 = vsel %vm243, %v242, 0
        %250 = vmatprep.subr.bf16.mxu0 0
        %251 = vmatpush1.bf16.xpose.msra.mxu0 0
        %252 = vmatprep.subr.bf16.mxu0 0
        %253 = vmatpush1.bf16.xpose.msra.mxu0 0
        %254 = vmatprep.subr.bf16.mxu0 0
        %255 = vmatpush1.bf16.xpose.msra.mxu0 0
        %256 = vmatprep.subr.bf16.mxu0 0
        %257 = vmatpush1.bf16.xpose.msra.mxu0 0
        %258 = vmatprep.subr.bf16.mxu0 0
        %259 = vmatpush1.bf16.xpose.msra.mxu0 0
        %260 = vmatprep.subr.bf16.mxu0 0
        %261 = vmatpush1.bf16.xpose.msra.mxu0 0
        %262 = vmatprep.subr.bf16.mxu0 0
        %263 = vmatpush1.bf16.xpose.msra.mxu0 0
        %264 = vmatprep.subr.bf16.mxu0 0
        %265 = vmatpush1.bf16.xpose.msra.mxu0 %v248
        %266 = vmatprep.subr.bf16.mxu0 0
        %267 = vmatpush2.bf16.xpose.msra.mxu0 0
        %268 = vmatprep.subr.bf16.mxu0 0
        %269 = vmatpush2.bf16.xpose.msra.mxu0 0
        %270 = vmatprep.subr.bf16.mxu0 0
        %271 = vmatpush2.bf16.xpose.msra.mxu0 0
        %272 = vmatprep.subr.bf16.mxu0 0
        %273 = vmatpush2.bf16.xpose.msra.mxu0 0
        %274 = vmatprep.subr.bf16.mxu0 0
        %275 = vmatpush2.bf16.xpose.msra.mxu0 0
        %276 = vmatprep.subr.bf16.mxu0 0
        %277 = vmatpush2.bf16.xpose.msra.mxu0 0
        %278 = vmatprep.subr.bf16.mxu0 0
        %279 = vmatpush2.bf16.xpose.msra.mxu0 0
        %280 = vmatprep.subr.bf16.mxu0 0
        %281 = vmatpush2.bf16.xpose.msra.mxu0 0
        %282 = vmatprep.mubr.bf16.mxu0 0
        %283 = vmatmul.mubr.bf16.gmra.mxu0 %v245
        %v284 = vpop.f32.mrf.mxu0
        %v285 = vadd.f32 0.0, %v284
        %v286 = vpop.f32.mrf.mxu0
        %v287 = vpop.f32.mrf.mxu0
        %v288 = vpop.f32.mrf.mxu0
        %289 = vdwg.mxu0
        %vm290 = vcmask 64512
        %v291 = vsel %vm290, %v285, -inf
        %292 = vmax.xlane.f32.xlu0 %v291
        %v293 = vpop.xlane.xlu0 %292
        %v294 = vsub.f32 %v285, %v293
        %v295 = vmul.f32 %v294, 1.442695
        %v296 = vpow.pop %v295
        %v297 = vsel %vm290, %v296, 0.0
        %298 = vadd.xlane.f32.xlu0 %v297
        %v299 = vpop.xlane.xlu0 %298
        %v300 = vrcp.pop %v299
        %v301 = vmul.f32 %v296, %v300
        %v302 = vpack.c.bf16 %v301, %v301
        %v304 = vsel %vm290, %v302, 0
        %vm306 = vcmask 1043456
        %v308 = vsel %vm306, %v239, 0
        %310 = vmatprep.subr.bf16.mxu0 0
        %311 = vmatpush1.bf16.msra.mxu0 0
        %312 = vmatprep.subr.bf16.mxu0 0
        %313 = vmatpush1.bf16.msra.mxu0 0
        %314 = vmatprep.subr.bf16.mxu0 0
        %315 = vmatpush1.bf16.msra.mxu0 0
        %316 = vmatprep.subr.bf16.mxu0 0
        %317 = vmatpush1.bf16.msra.mxu0 0
        %318 = vmatprep.subr.bf16.mxu0 0
        %319 = vmatpush1.bf16.msra.mxu0 0
        %320 = vmatprep.subr.bf16.mxu0 0
        %321 = vmatpush1.bf16.msra.mxu0 0
        %322 = vmatprep.subr.bf16.mxu0 0
        %323 = vmatpush1.bf16.msra.mxu0 0
        %324 = vmatprep.subr.bf16.mxu0 0
        %325 = vmatpush1.bf16.msra.mxu0 %v308
        %326 = vmatprep.subr.bf16.mxu0 0
        %327 = vmatpush2.bf16.msra.mxu0 0
        %328 = vmatprep.subr.bf16.mxu0 0
        %329 = vmatpush2.bf16.msra.mxu0 0
        %330 = vmatprep.subr.bf16.mxu0 0
        %331 = vmatpush2.bf16.msra.mxu0 0
        %332 = vmatprep.subr.bf16.mxu0 0
        %333 = vmatpush2.bf16.msra.mxu0 0
        %334 = vmatprep.subr.bf16.mxu0 0
        %335 = vmatpush2.bf16.msra.mxu0 0
        %336 = vmatprep.subr.bf16.mxu0 0
        %337 = vmatpush2.bf16.msra.mxu0 0
        %338 = vmatprep.subr.bf16.mxu0 0
        %339 = vmatpush2.bf16.msra.mxu0 0
        %340 = vmatprep.subr.bf16.mxu0 0
        %341 = vmatpush2.bf16.msra.mxu0 0
        %342 = vmatprep.mubr.bf16.mxu0 0
        %343 = vmatmul.mubr.bf16.gmra.mxu0 %v304
        %v344 = vpop.f32.mrf.mxu0
        %v345 = vadd.f32 0.0, %v344
        %v346 = vpop.f32.mrf.mxu0
        %v347 = vpop.f32.mrf.mxu0
        %v348 = vpop.f32.mrf.mxu0
        %349 = vdwg.mxu0
        %350 = vst.msk [vmem:[#allocation2] sm:$0xff] %vm243, %v345
        %351 = vrot.lane.b32.xlu0 %v238, 112
        %v352 = vpop.permute.xlu0 %351
        %353 = vrot.lane.b32.xlu0 %v238, 48
        %v354 = vpop.permute.xlu0 %353
        %v356 = vsel %vm243, %v352, 0
        %v359 = vsel %vm243, %v354, 0
        %361 = vmatprep.subr.bf16.mxu0 0
        %362 = vmatpush1.bf16.xpose.msra.mxu0 0
        %363 = vmatprep.subr.bf16.mxu0 0
        %364 = vmatpush1.bf16.xpose.msra.mxu0 0
        %365 = vmatprep.subr.bf16.mxu0 0
        %366 = vmatpush1.bf16.xpose.msra.mxu0 0
        %367 = vmatprep.subr.bf16.mxu0 0
        %368 = vmatpush1.bf16.xpose.msra.mxu0 0
        %369 = vmatprep.subr.bf16.mxu0 0
        %370 = vmatpush1.bf16.xpose.msra.mxu0 0
        %371 = vmatprep.subr.bf16.mxu0 0
        %372 = vmatpush1.bf16.xpose.msra.mxu0 0
        %373 = vmatprep.subr.bf16.mxu0 0
        %374 = vmatpush1.bf16.xpose.msra.mxu0 0
        %375 = vmatprep.subr.bf16.mxu0 0
        %376 = vmatpush1.bf16.xpose.msra.mxu0 %v359
        %377 = vmatprep.subr.bf16.mxu0 0
        %378 = vmatpush2.bf16.xpose.msra.mxu0 0
        %379 = vmatprep.subr.bf16.mxu0 0
        %380 = vmatpush2.bf16.xpose.msra.mxu0 0
        %381 = vmatprep.subr.bf16.mxu0 0
        %382 = vmatpush2.bf16.xpose.msra.mxu0 0
        %383 = vmatprep.subr.bf16.mxu0 0
        %384 = vmatpush2.bf16.xpose.msra.mxu0 0
        %385 = vmatprep.subr.bf16.mxu0 0
        %386 = vmatpush2.bf16.xpose.msra.mxu0 0
        %387 = vmatprep.subr.bf16.mxu0 0
        %388 = vmatpush2.bf16.xpose.msra.mxu0 0
        %389 = vmatprep.subr.bf16.mxu0 0
        %390 = vmatpush2.bf16.xpose.msra.mxu0 0
        %391 = vmatprep.subr.bf16.mxu0 0
        %392 = vmatpush2.bf16.xpose.msra.mxu0 0
        %393 = vmatprep.mubr.bf16.mxu0 0
        %394 = vmatmul.mubr.bf16.gmra.mxu0 %v356
        %v395 = vpop.f32.mrf.mxu0
        %v396 = vadd.f32 0.0, %v395
        %v397 = vpop.f32.mrf.mxu0
        %v398 = vpop.f32.mrf.mxu0
        %v399 = vpop.f32.mrf.mxu0
        %400 = vdwg.mxu0
        %v401 = vsel %vm290, %v396, -inf
        %402 = vmax.xlane.f32.xlu0 %v401
        %v403 = vpop.xlane.xlu0 %402
        %v404 = vsub.f32 %v396, %v403
        %v405 = vmul.f32 %v404, 1.442695
        %v406 = vpow.pop %v405
        %v407 = vsel %vm290, %v406, 0.0
        %408 = vadd.xlane.f32.xlu0 %v407
        %v409 = vpop.xlane.xlu0 %408
        %v410 = vrcp.pop %v409
        %v411 = vmul.f32 %v406, %v410
        %v412 = vpack.c.bf16 %v411, %v411
        %414 = vrot.lane.b32.xlu0 %v239, 112
        %v415 = vpop.permute.xlu0 %414
        %v417 = vsel %vm290, %v412, 0
        %v420 = vsel %vm306, %v415, 0
        %422 = vmatprep.subr.bf16.mxu0 0
        %423 = vmatpush1.bf16.msra.mxu0 0
        %424 = vmatprep.subr.bf16.mxu0 0
        %425 = vmatpush1.bf16.msra.mxu0 0
        %426 = vmatprep.subr.bf16.mxu0 0
        %427 = vmatpush1.bf16.msra.mxu0 0
        %428 = vmatprep.subr.bf16.mxu0 0
        %429 = vmatpush1.bf16.msra.mxu0 0
        %430 = vmatprep.subr.bf16.mxu0 0
        %431 = vmatpush1.bf16.msra.mxu0 0
        %432 = vmatprep.subr.bf16.mxu0 0
        %433 = vmatpush1.bf16.msra.mxu0 0
        %434 = vmatprep.subr.bf16.mxu0 0
        %435 = vmatpush1.bf16.msra.mxu0 0
        %436 = vmatprep.subr.bf16.mxu0 0
        %437 = vmatpush1.bf16.msra.mxu0 %v420
        %438 = vmatprep.subr.bf16.mxu0 0
        %439 = vmatpush2.bf16.msra.mxu0 0
        %440 = vmatprep.subr.bf16.mxu0 0
        %441 = vmatpush2.bf16.msra.mxu0 0
        %442 = vmatprep.subr.bf16.mxu0 0
        %443 = vmatpush2.bf16.msra.mxu0 0
        %444 = vmatprep.subr.bf16.mxu0 0
        %445 = vmatpush2.bf16.msra.mxu0 0
        %446 = vmatprep.subr.bf16.mxu0 0
        %447 = vmatpush2.bf16.msra.mxu0 0
        %448 = vmatprep.subr.bf16.mxu0 0
        %449 = vmatpush2.bf16.msra.mxu0 0
        %450 = vmatprep.subr.bf16.mxu0 0
        %451 = vmatpush2.bf16.msra.mxu0 0
        %452 = vmatprep.subr.bf16.mxu0 0
        %453 = vmatpush2.bf16.msra.mxu0 0
        %454 = vmatprep.mubr.bf16.mxu0 0
        %455 = vmatmul.mubr.bf16.gmra.mxu0 %v417
        %v456 = vpop.f32.mrf.mxu0
        %v457 = vadd.f32 0.0, %v456
        %v458 = vpop.f32.mrf.mxu0
        %v459 = vpop.f32.mrf.mxu0
        %v460 = vpop.f32.mrf.mxu0
        %461 = vdwg.mxu0
        %463 = vrot.lane.b32.xlu0 %v457, 16
        %v464 = vpop.permute.xlu0 %463
        %vm466 = vcmask 261248
        %467 = vst.msk [vmem:[#allocation2] sm:$0xff] %vm466, %v464
        %468 = vrot.lane.b32.xlu0 %v238, 96
        %v469 = vpop.permute.xlu0 %468
        %470 = vrot.lane.b32.xlu0 %v238, 32
        %v471 = vpop.permute.xlu0 %470
        %v473 = vsel %vm243, %v469, 0
        %v476 = vsel %vm243, %v471, 0
        %478 = vmatprep.subr.bf16.mxu0 0
        %479 = vmatpush1.bf16.xpose.msra.mxu0 0
        %480 = vmatprep.subr.bf16.mxu0 0
        %481 = vmatpush1.bf16.xpose.msra.mxu0 0
        %482 = vmatprep.subr.bf16.mxu0 0
        %483 = vmatpush1.bf16.xpose.msra.mxu0 0
        %484 = vmatprep.subr.bf16.mxu0 0
        %485 = vmatpush1.bf16.xpose.msra.mxu0 0
        %486 = vmatprep.subr.bf16.mxu0 0
        %487 = vmatpush1.bf16.xpose.msra.mxu0 0
        %488 = vmatprep.subr.bf16.mxu0 0
        %489 = vmatpush1.bf16.xpose.msra.mxu0 0
        %490 = vmatprep.subr.bf16.mxu0 0
        %491 = vmatpush1.bf16.xpose.msra.mxu0 0
        %492 = vmatprep.subr.bf16.mxu0 0
        %493 = vmatpush1.bf16.xpose.msra.mxu0 %v476
        %494 = vmatprep.subr.bf16.mxu0 0
        %495 = vmatpush2.bf16.xpose.msra.mxu0 0
        %496 = vmatprep.subr.bf16.mxu0 0
        %497 = vmatpush2.bf16.xpose.msra.mxu0 0
        %498 = vmatprep.subr.bf16.mxu0 0
        %499 = vmatpush2.bf16.xpose.msra.mxu0 0
        %500 = vmatprep.subr.bf16.mxu0 0
        %501 = vmatpush2.bf16.xpose.msra.mxu0 0
        %502 = vmatprep.subr.bf16.mxu0 0
        %503 = vmatpush2.bf16.xpose.msra.mxu0 0
        %504 = vmatprep.subr.bf16.mxu0 0
        %505 = vmatpush2.bf16.xpose.msra.mxu0 0
        %506 = vmatprep.subr.bf16.mxu0 0
        %507 = vmatpush2.bf16.xpose.msra.mxu0 0
        %508 = vmatprep.subr.bf16.mxu0 0
        %509 = vmatpush2.bf16.xpose.msra.mxu0 0
        %510 = vmatprep.mubr.bf16.mxu0 0
        %511 = vmatmul.mubr.bf16.gmra.mxu0 %v473
        %v512 = vpop.f32.mrf.mxu0
        %v513 = vadd.f32 0.0, %v512
        %v514 = vpop.f32.mrf.mxu0
        %v515 = vpop.f32.mrf.mxu0
        %v516 = vpop.f32.mrf.mxu0
        %517 = vdwg.mxu0
        %v518 = vsel %vm290, %v513, -inf
        %519 = vmax.xlane.f32.xlu0 %v518
        %v520 = vpop.xlane.xlu0 %519
        %v521 = vsub.f32 %v513, %v520
        %v522 = vmul.f32 %v521, 1.442695
        %v523 = vpow.pop %v522
        %v524 = vsel %vm290, %v523, 0.0
        %525 = vadd.xlane.f32.xlu0 %v524
        %v526 = vpop.xlane.xlu0 %525
        %v527 = vrcp.pop %v526
        %v528 = vmul.f32 %v523, %v527
        %v529 = vpack.c.bf16 %v528, %v528
        %530 = vrot.lane.b32.xlu0 %v239, 96
        %v531 = vpop.permute.xlu0 %530
        %v533 = vsel %vm290, %v529, 0
        %v536 = vsel %vm306, %v531, 0
        %538 = vmatprep.subr.bf16.mxu0 0
        %539 = vmatpush1.bf16.msra.mxu0 0
        %540 = vmatprep.subr.bf16.mxu0 0
        %541 = vmatpush1.bf16.msra.mxu0 0
        %542 = vmatprep.subr.bf16.mxu0 0
        %543 = vmatpush1.bf16.msra.mxu0 0
        %544 = vmatprep.subr.bf16.mxu0 0
        %545 = vmatpush1.bf16.msra.mxu0 0
        %546 = vmatprep.subr.bf16.mxu0 0
        %547 = vmatpush1.bf16.msra.mxu0 0
        %548 = vmatprep.subr.bf16.mxu0 0
        %549 = vmatpush1.bf16.msra.mxu0 0
        %550 = vmatprep.subr.bf16.mxu0 0
        %551 = vmatpush1.bf16.msra.mxu0 0
        %552 = vmatprep.subr.bf16.mxu0 0
        %553 = vmatpush1.bf16.msra.mxu0 %v536
        %554 = vmatprep.subr.bf16.mxu0 0
        %555 = vmatpush2.bf16.msra.mxu0 0
        %556 = vmatprep.subr.bf16.mxu0 0
        %557 = vmatpush2.bf16.msra.mxu0 0
        %558 = vmatprep.subr.bf16.mxu0 0
        %559 = vmatpush2.bf16.msra.mxu0 0
        %560 = vmatprep.subr.bf16.mxu0 0
        %561 = vmatpush2.bf16.msra.mxu0 0
        %562 = vmatprep.subr.bf16.mxu0 0
        %563 = vmatpush2.bf16.msra.mxu0 0
        %564 = vmatprep.subr.bf16.mxu0 0
        %565 = vmatpush2.bf16.msra.mxu0 0
        %566 = vmatprep.subr.bf16.mxu0 0
        %567 = vmatpush2.bf16.msra.mxu0 0
        %568 = vmatprep.subr.bf16.mxu0 0
        %569 = vmatpush2.bf16.msra.mxu0 0
        %570 = vmatprep.mubr.bf16.mxu0 0
        %571 = vmatmul.mubr.bf16.gmra.mxu0 %v533
        %v572 = vpop.f32.mrf.mxu0
        %v573 = vadd.f32 0.0, %v572
        %v574 = vpop.f32.mrf.mxu0
        %v575 = vpop.f32.mrf.mxu0
        %v576 = vpop.f32.mrf.mxu0
        %577 = vdwg.mxu0
        %579 = vrot.lane.b32.xlu0 %v573, 32
        %v580 = vpop.permute.xlu0 %579
        %vm582 = vcmask 392448
        %583 = vst.msk [vmem:[#allocation2] sm:$0xff] %vm582, %v580
        %584 = vrot.lane.b32.xlu0 %v238, 80
        %v585 = vpop.permute.xlu0 %584
        %586 = vrot.lane.b32.xlu0 %v238, 16
        %v587 = vpop.permute.xlu0 %586
        %v589 = vsel %vm243, %v585, 0
        %v592 = vsel %vm243, %v587, 0
        %594 = vmatprep.subr.bf16.mxu0 0
        %595 = vmatpush1.bf16.xpose.msra.mxu0 0
        %596 = vmatprep.subr.bf16.mxu0 0
        %597 = vmatpush1.bf16.xpose.msra.mxu0 0
        %598 = vmatprep.subr.bf16.mxu0 0
        %599 = vmatpush1.bf16.xpose.msra.mxu0 0
        %600 = vmatprep.subr.bf16.mxu0 0
        %601 = vmatpush1.bf16.xpose.msra.mxu0 0
        %602 = vmatprep.subr.bf16.mxu0 0
        %603 = vmatpush1.bf16.xpose.msra.mxu0 0
        %604 = vmatprep.subr.bf16.mxu0 0
        %605 = vmatpush1.bf16.xpose.msra.mxu0 0
        %606 = vmatprep.subr.bf16.mxu0 0
        %607 = vmatpush1.bf16.xpose.msra.mxu0 0
        %608 = vmatprep.subr.bf16.mxu0 0
        %609 = vmatpush1.bf16.xpose.msra.mxu0 %v592
        %610 = vmatprep.subr.bf16.mxu0 0
        %611 = vmatpush2.bf16.xpose.msra.mxu0 0
        %612 = vmatprep.subr.bf16.mxu0 0
        %613 = vmatpush2.bf16.xpose.msra.mxu0 0
        %614 = vmatprep.subr.bf16.mxu0 0
        %615 = vmatpush2.bf16.xpose.msra.mxu0 0
        %616 = vmatprep.subr.bf16.mxu0 0
        %617 = vmatpush2.bf16.xpose.msra.mxu0 0
        %618 = vmatprep.subr.bf16.mxu0 0
        %619 = vmatpush2.bf16.xpose.msra.mxu0 0
        %620 = vmatprep.subr.bf16.mxu0 0
        %621 = vmatpush2.bf16.xpose.msra.mxu0 0
        %622 = vmatprep.subr.bf16.mxu0 0
        %623 = vmatpush2.bf16.xpose.msra.mxu0 0
        %624 = vmatprep.subr.bf16.mxu0 0
        %625 = vmatpush2.bf16.xpose.msra.mxu0 0
        %626 = vmatprep.mubr.bf16.mxu0 0
        %627 = vmatmul.mubr.bf16.gmra.mxu0 %v589
        %v628 = vpop.f32.mrf.mxu0
        %v629 = vadd.f32 0.0, %v628
        %v630 = vpop.f32.mrf.mxu0
        %v631 = vpop.f32.mrf.mxu0
        %v632 = vpop.f32.mrf.mxu0
        %633 = vdwg.mxu0
        %v634 = vsel %vm290, %v629, -inf
        %635 = vmax.xlane.f32.xlu0 %v634
        %v636 = vpop.xlane.xlu0 %635
        %v637 = vsub.f32 %v629, %v636
        %v638 = vmul.f32 %v637, 1.442695
        %v639 = vpow.pop %v638
        %v640 = vsel %vm290, %v639, 0.0
        %641 = vadd.xlane.f32.xlu0 %v640
        %v642 = vpop.xlane.xlu0 %641
        %v643 = vrcp.pop %v642
        %v644 = vmul.f32 %v639, %v643
        %v645 = vpack.c.bf16 %v644, %v644
        %646 = vrot.lane.b32.xlu0 %v239, 80
        %v647 = vpop.permute.xlu0 %646
        %v649 = vsel %vm290, %v645, 0
        %v652 = vsel %vm306, %v647, 0
        %654 = vmatprep.subr.bf16.mxu0 0
        %655 = vmatpush1.bf16.msra.mxu0 0
        %656 = vmatprep.subr.bf16.mxu0 0
        %657 = vmatpush1.bf16.msra.mxu0 0
        %658 = vmatprep.subr.bf16.mxu0 0
        %659 = vmatpush1.bf16.msra.mxu0 0
        %660 = vmatprep.subr.bf16.mxu0 0
        %661 = vmatpush1.bf16.msra.mxu0 0
        %662 = vmatprep.subr.bf16.mxu0 0
        %663 = vmatpush1.bf16.msra.mxu0 0
        %664 = vmatprep.subr.bf16.mxu0 0
        %665 = vmatpush1.bf16.msra.mxu0 0
        %666 = vmatprep.subr.bf16.mxu0 0
        %667 = vmatpush1.bf16.msra.mxu0 0
        %668 = vmatprep.subr.bf16.mxu0 0
        %669 = vmatpush1.bf16.msra.mxu0 %v652
        %670 = vmatprep.subr.bf16.mxu0 0
        %671 = vmatpush2.bf16.msra.mxu0 0
        %672 = vmatprep.subr.bf16.mxu0 0
        %673 = vmatpush2.bf16.msra.mxu0 0
        %674 = vmatprep.subr.bf16.mxu0 0
        %675 = vmatpush2.bf16.msra.mxu0 0
        %676 = vmatprep.subr.bf16.mxu0 0
        %677 = vmatpush2.bf16.msra.mxu0 0
        %678 = vmatprep.subr.bf16.mxu0 0
        %679 = vmatpush2.bf16.msra.mxu0 0
        %680 = vmatprep.subr.bf16.mxu0 0
        %681 = vmatpush2.bf16.msra.mxu0 0
        %682 = vmatprep.subr.bf16.mxu0 0
        %683 = vmatpush2.bf16.msra.mxu0 0
        %684 = vmatprep.subr.bf16.mxu0 0
        %685 = vmatpush2.bf16.msra.mxu0 0
        %686 = vmatprep.mubr.bf16.mxu0 0
        %687 = vmatmul.mubr.bf16.gmra.mxu0 %v649
        %v688 = vpop.f32.mrf.mxu0
        %v689 = vadd.f32 0.0, %v688
        %v690 = vpop.f32.mrf.mxu0
        %v691 = vpop.f32.mrf.mxu0
        %v692 = vpop.f32.mrf.mxu0
        %693 = vdwg.mxu0
        %695 = vrot.lane.b32.xlu0 %v689, 48
        %v696 = vpop.permute.xlu0 %695
        %vm698 = vcmask 523648
        %699 = vst.msk [vmem:[#allocation2] sm:$0xff] %vm698, %v696
        %v700 = vld [vmem:[#allocation2] sm:$0xff]
        %v701 = vpack.c.bf16 %v700, %v700
        %v702 = vld [vmem:[%s2] sm:$0xf]
        %v703 = vld [vmem:[%s2 + $0x4] sm:$0xf]
        %v704 = vld [vmem:[%s2 + $0x8] sm:$0xf]
        %v705 = vld [vmem:[%s2 + $0xc] sm:$0xf]
        %v706 = vld [vmem:[%s2 + $0x10] sm:$0xf]
        %v707 = vld [vmem:[%s2 + $0x14] sm:$0xf]
        %v708 = vld [vmem:[%s2 + $0x18] sm:$0xf]
        %v709 = vld [vmem:[%s2 + $0x1c] sm:$0xf]
        %v718 = vunpack.c.l.b16 %v702
        %v719 = vunpack.c.l.b16 %v703
        %v720 = vunpack.c.l.b16 %v704
        %v721 = vunpack.c.l.b16 %v705
        %v722 = vunpack.c.l.b16 %v706
        %v723 = vunpack.c.l.b16 %v707
        %v724 = vunpack.c.l.b16 %v708
        %v725 = vunpack.c.l.b16 %v709
        %v726 = vpack.c.b16 %v719, %v718
        %v727 = vpack.c.b16 %v721, %v720
        %v728 = vpack.c.b16 %v723, %v722
        %v729 = vpack.c.b16 %v725, %v724
        %vm734 = vcmask 523264
        %v736 = vsel %vm734, %v701, 0
        %738 = vmatprep.subr.bf16.mxu0 0
        %739 = vmatpush1.bf16.msra.mxu0 0
        %740 = vmatprep.subr.bf16.mxu0 0
        %741 = vmatpush1.bf16.msra.mxu0 0
        %742 = vmatprep.subr.bf16.mxu0 0
        %743 = vmatpush1.bf16.msra.mxu0 0
        %744 = vmatprep.subr.bf16.mxu0 0
        %745 = vmatpush1.bf16.msra.mxu0 0
        %746 = vmatprep.subr.bf16.mxu0 0
        %747 = vmatpush1.bf16.msra.mxu0 %v729
        %748 = vmatprep.subr.bf16.mxu0 0
        %749 = vmatpush1.bf16.msra.mxu0 %v728
        %750 = vmatprep.subr.bf16.mxu0 0
        %751 = vmatpush1.bf16.msra.mxu0 %v727
        %752 = vmatprep.subr.bf16.mxu0 0
        %753 = vmatpush1.bf16.msra.mxu0 %v726
        %754 = vmatprep.subr.bf16.mxu0 0
        %755 = vmatpush2.bf16.msra.mxu0 0
        %756 = vmatprep.subr.bf16.mxu0 0
        %757 = vmatpush2.bf16.msra.mxu0 0
        %758 = vmatprep.subr.bf16.mxu0 0
        %759 = vmatpush2.bf16.msra.mxu0 0
        %760 = vmatprep.subr.bf16.mxu0 0
        %761 = vmatpush2.bf16.msra.mxu0 0
        %762 = vmatprep.subr.bf16.mxu0 0
        %763 = vmatpush2.bf16.msra.mxu0 0
        %764 = vmatprep.subr.bf16.mxu0 0
        %765 = vmatpush2.bf16.msra.mxu0 0
        %766 = vmatprep.subr.bf16.mxu0 0
        %767 = vmatpush2.bf16.msra.mxu0 0
        %768 = vmatprep.subr.bf16.mxu0 0
        %769 = vmatpush2.bf16.msra.mxu0 0
        %770 = vmatprep.mubr.bf16.mxu0 0
        %771 = vmatmul.mubr.bf16.gmra.mxu0 %v736
        %v772 = vpop.f32.mrf.mxu0
        %v773 = vadd.f32 0.0, %v772
        %v774 = vpop.f32.mrf.mxu0
        %v775 = vpop.f32.mrf.mxu0
        %v776 = vpop.f32.mrf.mxu0
        %777 = vdwg.mxu0
        %778 = vst.msk [vmem:[%s161] sm:$0xff] %vm193, %v773
        %s779 = sand.u32 %s93, 1
        %s780 = scalar_lea.sflag [#allocation4], %s779
        %s781 = sand.u32 %s93, 1
        %s782 = smul.addr %s781, 8
        %s783 = scalar_lea.vmem [#allocation3], %s782
        // Predicated region
        $region33: #{tpu_custom_call.1} parent=31 // pred_check
          %p784 = pneg %p103
        $region34: #{tpu_custom_call.1} parent=31 // pred_check_branch
          %786 = sbr.rel (%p784) target = $region36
        $region35: #{tpu_custom_call.1} parent=31 // pred_region
          %s788 = ssub.s32 128, 128
          %789 = vsyncadd %s780, %s788
          %s790 = smul.addr %s17, 128
          %s791 = scalar_lea.hbm %s3, %s790
          %s793 = sshll.u32 %s783, 4
          %s794 = int_to_ptr.vmem [resolvable:$true] %s793
          %796 = dma.vmem_to_hbm [thread:$0]  %s794, 128, %s791, %s780
        $region36: #{tpu_custom_call.1} parent=31 // pred_fallthru
          _
      $region32: #{tpu_custom_call.1} parent=5 // pred_fallthru
        _
      %p797 = scmp.le.s32.totalorder 2, %s12
      // Predicated region
      $region37: #{tpu_custom_call.1} parent=5 // pred_check
        %p798 = pneg %p797
      $region38: #{tpu_custom_call.1} parent=5 // pred_check_branch
        %800 = sbr.rel (%p798) target = $region40
      $region39: #{tpu_custom_call.1} parent=5 // pred_region
        %s801 = ssub.s32 %s12, 2
        // Predicated region
        $region41: #{tpu_custom_call.1} parent=39 // pred_check
          %p802 = pneg %p109
        $region42: #{tpu_custom_call.1} parent=39 // pred_check_branch
          %804 = sbr.rel (%p802) target = $region44
        $region43: #{tpu_custom_call.1} parent=39 // pred_region
          %s805 = sand.u32 %s94, 1
          %s806 = scalar_lea.sflag [#allocation4], %s805
          %s807 = sand.u32 %s94, 1
          %s808 = smul.addr %s807, 8
          %s809 = scalar_lea.vmem [#allocation3], %s808
          %810 = dma.done %s806, 128
        $region44: #{tpu_custom_call.1} parent=39 // pred_fallthru
          _
      $region40: #{tpu_custom_call.1} parent=5 // pred_fallthru
        _
    $region6: #{tpu_custom_call.1} parent=1 // loop_footer
      %s16 = sadd.s32 1, %s12
    $region7: #{tpu_custom_call.1} parent=1 // loop_footer_branch
      %11 = sbr.rel target = $region3
    $region8: #{tpu_custom_call.1} parent=1 // loop_exit
      _
    %811 = vsyncpa [#allocation4], 1
    %s812 = scalar_lea.sflag [#allocation4], 1
    %813 = vsyncpa %s812, 1

</llo_original>
